<compile_context>
chip_gen: v5e
topology: v5e:2x2
jax: 0.10.0
libtpu: 0.0.40
codegen_flags: <defaults>
</compile_context>

<pallas_src>
import functools

import jax
import jax.numpy as jnp
from jax import lax
from jax.experimental import pallas as pl
from jax.experimental.pallas import tpu as pltpu


def _global_alignment_kernel(img_ref, tbl_ref,            # inputs  (bf16, pre-normalized)
                             row_lse_ref, colm_ref, coll_ref,   # outputs (f32)
                             m_row_ref, l_row_ref):        # scratch (f32)
    j = pl.program_id(1)
    nj = pl.num_programs(1)

    # Reset the row-direction online-LSE state at the start of each row tile.
    @pl.when(j == 0)
    def _():
        m_row_ref[...] = jnp.full_like(m_row_ref, -jnp.inf)
        l_row_ref[...] = jnp.zeros_like(l_row_ref)

    # (tm, tm) scaled-similarity tile straight off the MXU: bf16 operands, f32 accumulation,
    # contraction on D (no transpose).  logit_scale is already folded into img_ref.
    s = lax.dot_general(img_ref[...], tbl_ref[...],
                        dimension_numbers=(((1,), (1,)), ((), ())),
                        preferred_element_type=jnp.float32)

    tm = s.shape[0]
    r = jnp.max(s, axis=-1, keepdims=True)        # (tm, 1) per-row tile-local max   (XLU)
    cmax = jnp.max(s, axis=0, keepdims=True)      # (1, tm) per-col tile-local max   (XLU)
    c = jnp.max(r)                                # scalar tile max

    # Single shared exp tile (EUP); all entries in (0, 1].
    p = jnp.exp(s - r)                            # (tm, tm)

    # ---------------- row direction (image -> table): online LSE across j ----------------
    m_prev = m_row_ref[...]
    m_new = jnp.maximum(m_prev, r)
    # Row sums of p on the MXU instead of the XLU.
    rowsum = lax.dot_general(p, jnp.ones((tm, 1), jnp.float32),
                             dimension_numbers=(((1,), (0,)), ((), ())),
                             preferred_element_type=jnp.float32)            # (tm, 1)
    l_row_ref[...] = (l_row_ref[...] * jnp.exp(m_prev - m_new)
                      + rowsum * jnp.exp(r - m_new))
    m_row_ref[...] = m_new

    # ------------- column direction (table -> image): per-(i, j) partials -------------
    # sum_i exp(s_ij - cmax_j) computed from the shared exp tile:
    #   u_i = exp(r_i - c);  (u^T @ p)_j = sum_i exp(s_ij - c);  rescale by exp(c - cmax_j).
    # Valid while the intra-tile logit range (<= 2*logit_scale) fits the f32 exp range.
    u = jnp.exp(r - c)                                                       # (tm, 1)
    wsum = lax.dot_general(u, p,
                           dimension_numbers=(((0,), (0,)), ((), ())),
                           preferred_element_type=jnp.float32)               # (1, tm) on MXU
    coll = wsum * jnp.exp(jnp.minimum(c - cmax, 80.0))                       # inf guard
    colm_ref[...] = cmax.reshape(colm_ref.shape)
    coll_ref[...] = coll.reshape(coll_ref.shape)

    # --------------------- finalize the row LSE of this row tile ---------------------
    @pl.when(j == nj - 1)
    def _():
        row_lse_ref[...] = m_row_ref[...] + jnp.log(l_row_ref[...])


def _pick_block_rows(batch):
    # MXU-friendly defaults: 256-row tiles for large batches (v6e/v7x 256x256 MXU, two
    # passes of v5e's 128x128), 128 for mid-size, and one padded tile (multiple of 16 for
    # bf16 sublane packing) for tiny batches.
    if batch >= 512:
        return 256
    if batch >= 128:
        return 128
    return max(16, ((batch + 15) // 16) * 16)


def _vmem_limit_bytes():
    # Generation-aware VMEM budget: ~75% of physical per-core VMEM, capped at 100 MiB
    # (~96 MiB on 128 MiB v5e/v6e, ~48 MiB on 64 MiB-per-core v7x).  Conservative 64 MiB
    # fallback if the query is unavailable.
    try:
        cap = int(getattr(pltpu.get_tpu_info(), "vmem_capacity_bytes", 0))
    except Exception:
        cap = 0
    if cap <= 0:
        return 64 * 1024 * 1024
    return max(32 * 1024 * 1024, min((cap * 3) // 4, 100 * 1024 * 1024))


@functools.partial(jax.jit, static_argnames=("block_rows",))
def global_alignment_loss(logit_scale_param, image_embed, table_embed, *, block_rows=None):
    """Forward of GlobalAlignmentLoss: logit_scale = exp(param); CLIP loss over (B, D) embeds."""
    batch, dim = image_embed.shape
    assert table_embed.shape == (batch, dim)

    tm = _pick_block_rows(batch) if block_rows is None else block_rows
    assert tm % 16 == 0 and tm > 0, "block_rows must be a positive multiple of 16"
    b_pad = ((batch + tm - 1) // tm) * tm
    n_pad = b_pad - batch
    n_tiles = b_pad // tm

    scale = jnp.exp(jnp.asarray(logit_scale_param, jnp.float32))

    # ---- hoisted: L2 normalize (f32), fold logit_scale into the image operand, cast bf16 ----
    def _normalize(x):
        x = x.astype(jnp.float32)
        n = jnp.sqrt(jnp.sum(x * x, axis=-1, keepdims=True))
        return x / jnp.maximum(n, 1e-12)            # matches F.normalize(eps=1e-12)

    img_bf = (_normalize(image_embed) * scale).astype(jnp.bfloat16)   # (B, D)
    tbl_bf = _normalize(table_embed).astype(jnp.bfloat16)             # (B, D)

    # Diagonal logits from the SAME bf16-rounded operands as the MXU matmul (cheap O(B*D)).
    diag = jnp.sum(img_bf.astype(jnp.float32) * tbl_bf.astype(jnp.float32), axis=-1)  # (B,)

    if n_pad:
        # Zero pad rows normalize to exact zero vectors -> padded logits are exactly 0.
        img_bf = jnp.pad(img_bf, ((0, n_pad), (0, 0)))
        tbl_bf = jnp.pad(tbl_bf, ((0, n_pad), (0, 0)))

    row_lse, colm, coll = pl.pallas_call(
        _global_alignment_kernel,
        grid=(n_tiles, n_tiles),
        in_specs=[
            # Image row tile: constant across the inner j loop (re-used, not re-DMA'd).
            pl.BlockSpec((tm, dim), lambda i, j: (i, 0)),
            # Table row tile: streamed every inner step (bf16 halves its HBM traffic).
            # If v5e profiling shows exposed DMA at small D, add pipeline_mode=pl.Buffered(3).
            pl.BlockSpec((tm, dim), lambda i, j: (j, 0)),
        ],
        out_shape=(
            jax.ShapeDtypeStruct((b_pad, 1), jnp.float32),                    # per-row LSE
            jax.ShapeDtypeStruct((n_tiles, n_tiles, 1, tm), jnp.float32),     # col partial max
            jax.ShapeDtypeStruct((n_tiles, n_tiles, 1, tm), jnp.float32),     # col partial sum
        ),
        out_specs=(
            pl.BlockSpec((tm, 1), lambda i, j: (i, 0)),
            pl.BlockSpec((1, 1, 1, tm), lambda i, j: (i, j, 0, 0)),
            pl.BlockSpec((1, 1, 1, tm), lambda i, j: (i, j, 0, 0)),
        ),
        scratch_shapes=[
            pltpu.VMEM((tm, 1), jnp.float32),   # row running max
            pltpu.VMEM((tm, 1), jnp.float32),   # row running sum
        ],
        compiler_params=pltpu.CompilerParams(
            # i carries no cross-iteration state -> megacore-parallel on v7x (2 TCs).
            dimension_semantics=("parallel", "arbitrary"),
            vmem_limit_bytes=_vmem_limit_bytes(),
        ),
    )(img_bf, tbl_bf)

    # ---- tiny trailing combine in JAX (O(n_tiles * B)) ----
    colm = colm.reshape(n_tiles, b_pad)
    coll = coll.reshape(n_tiles, b_pad)
    col_max = jnp.max(colm, axis=0)
    col_sum = jnp.sum(coll * jnp.exp(colm - col_max[None, :]), axis=0)
    lse_col = col_max + jnp.log(col_sum)

    lse_row = row_lse[:batch, 0]
    lse_col = lse_col[:batch]

    if n_pad:
        # Each of the n_pad pads contributes exactly exp(0) = 1 to every real row/column
        # LSE (pad embeddings are exact zero vectors); remove that contribution exactly.
        lse_row = lse_row + jnp.log1p(-n_pad * jnp.exp(-lse_row))
        lse_col = lse_col + jnp.log1p(-n_pad * jnp.exp(-lse_col))

    # (image CE + table CE) / 2  ==  (sum lse_row + sum lse_col - 2 * sum diag) / (2B)
    return (jnp.sum(lse_row) + jnp.sum(lse_col) - 2.0 * jnp.sum(diag)) / (2.0 * batch)


def _reference_loss(logit_scale_param, image_embed, table_embed):
    scale = jnp.exp(logit_scale_param)
    img_n = image_embed / jnp.maximum(
        jnp.linalg.norm(image_embed, axis=-1, keepdims=True), 1e-12)
    tbl_n = table_embed / jnp.maximum(
        jnp.linalg.norm(table_embed, axis=-1, keepdims=True), 1e-12)
    logits = scale * (img_n @ tbl_n.T)
    labels = jnp.arange(image_embed.shape[0])

    def ce(lg):
        lse = jax.nn.logsumexp(lg, axis=-1)
        return jnp.mean(lse - lg[labels, labels])

    return 0.5 * (ce(logits) + ce(logits.T))


if __name__ == "__main__":
    key = jax.random.PRNGKey(0)
    k_img, k_tbl = jax.random.split(key)

    # B=40 with 16-row tiles: exercises padding (-> 48), the 3x3 tile grid, the online
    # row LSE across j and the cross-row-tile column combine.
    B, D = 40, 64
    image_embed = jax.random.normal(k_img, (B, D), dtype=jnp.float32)
    table_embed = jax.random.normal(k_tbl, (B, D), dtype=jnp.float32)
    logit_scale_param = jnp.array(2.6592, dtype=jnp.float32)   # ~log(1/0.07), CLIP init

    loss = global_alignment_loss(logit_scale_param, image_embed, table_embed, block_rows=16)
    jax.block_until_ready(loss)
    ref = _reference_loss(logit_scale_param, image_embed, table_embed)
    assert loss.shape == () and bool(jnp.isfinite(loss)), loss
    assert abs(float(loss) - float(ref)) < 1e-2, (float(loss), float(ref))

    # No-padding / single-tile path with the default tile policy.
    loss2 = global_alignment_loss(logit_scale_param, image_embed[:32], table_embed[:32])
    jax.block_until_ready(loss2)
    ref2 = _reference_loss(logit_scale_param, image_embed[:32], table_embed[:32])
    assert abs(float(loss2) - float(ref2)) < 1e-2, (float(loss2), float(ref2))

    print("KERNEL_OK")
</pallas_src>

<mosaic_0001>
module attributes {stable_mosaic.version = 11 : i64} {
  func.func @_global_alignment_kernel(%arg0: i32, %arg1: i32, %arg2: memref<16x64xbf16, #tpu.memory_space<vmem>>, %arg3: memref<16x64xbf16, #tpu.memory_space<vmem>>, %arg4: memref<16x1xf32, #tpu.memory_space<vmem>>, %arg5: memref<1x1x1x16xf32, #tpu.memory_space<vmem>>, %arg6: memref<1x1x1x16xf32, #tpu.memory_space<vmem>>, %arg7: memref<16x1xf32, #tpu.memory_space<vmem>>, %arg8: memref<16x1xf32, #tpu.memory_space<vmem>>) attributes {dimension_semantics = [#tpu.dimension_semantics<parallel>, #tpu.dimension_semantics<arbitrary>], iteration_bounds = array<i64: 3, 3>, scalar_prefetch = 0 : i64, scratch_operands = 2 : i64, tpu.core_type = #tpu.core_type<tc>, window_params = [{transform_indices = @transform_0, window_bounds = array<i64: 16, 64>}, {transform_indices = @transform_1, window_bounds = array<i64: 16, 64>}, {transform_indices = @transform_2, window_bounds = array<i64: 16, 1>}, {transform_indices = @transform_3, window_bounds = array<i64: 1, 1, 1, 16>}, {transform_indices = @transform_4, window_bounds = array<i64: 1, 1, 1, 16>}]} {
    %c0_i32 = arith.constant 0 : i32
    %0 = arith.cmpi eq, %arg1, %c0_i32 : i32
    %1 = arith.extui %0 : i1 to i32
    %c0_i32_0 = arith.constant 0 : i32
    %2 = arith.cmpi ne, %1, %c0_i32_0 : i32
    scf.if %2 {
      %cst_28 = arith.constant 0xFF800000 : f32
      %48 = vector.broadcast %cst_28 : f32 to vector<16x1xf32>
      %c0_29 = arith.constant 0 : index
      %c0_30 = arith.constant 0 : index
      %49 = vector.load %arg7[%c0_29, %c0_30] : memref<16x1xf32, #tpu.memory_space<vmem>>, vector<16x1xf32>
      tpu.vector_store %arg7[%c0_29, %c0_30], %48 {strides = array<i32>} : memref<16x1xf32, #tpu.memory_space<vmem>>, vector<16x1xf32>,
      %cst_31 = arith.constant 0.000000e+00 : f32
      %50 = vector.broadcast %cst_31 : f32 to vector<16x1xf32>
      %c0_32 = arith.constant 0 : index
      %c0_33 = arith.constant 0 : index
      %51 = vector.load %arg8[%c0_32, %c0_33] : memref<16x1xf32, #tpu.memory_space<vmem>>, vector<16x1xf32>
      tpu.vector_store %arg8[%c0_32, %c0_33], %50 {strides = array<i32>} : memref<16x1xf32, #tpu.memory_space<vmem>>, vector<16x1xf32>,
    } else {
    }
    %c0 = arith.constant 0 : index
    %c0_1 = arith.constant 0 : index
    %3 = vector.load %arg2[%c0, %c0_1] : memref<16x64xbf16, #tpu.memory_space<vmem>>, vector<16x64xbf16>
    %c0_2 = arith.constant 0 : index
    %c0_3 = arith.constant 0 : index
    %4 = vector.load %arg3[%c0_2, %c0_3] : memref<16x64xbf16, #tpu.memory_space<vmem>>, vector<16x64xbf16>
    %cst = arith.constant dense<0.000000e+00> : vector<16x16xf32>
    %5 = tpu.matmul %3, %4, %cst {dimension_numbers = #tpu.dot_dimension_numbers<[1], [1], [0], [0], [0, 0, 1, 0], [], []>} : vector<16x64xbf16>, vector<16x64xbf16>, vector<16x16xf32> -> vector<16x16xf32>
    %cst_4 = arith.constant dense<0xFF800000> : vector<16xf32>
    %6 = vector.multi_reduction <maximumf>, %5, %cst_4 [1] : vector<16x16xf32> to vector<16xf32>
    %7 = vector.shape_cast %6 : vector<16xf32> to vector<16x1xf32>
    %cst_5 = arith.constant dense<0xFF800000> : vector<16xf32>
    %8 = vector.multi_reduction <maximumf>, %5, %cst_5 [0] : vector<16x16xf32> to vector<16xf32>
    %9 = vector.shape_cast %8 : vector<16xf32> to vector<1x16xf32>
    %10 = vector.shape_cast %7 : vector<16x1xf32> to vector<1x16x1xf32>
    %cst_6 = arith.constant dense<0xFF800000> : vector<1xf32>
    %11 = vector.multi_reduction <maximumf>, %10, %cst_6 [1, 2] : vector<1x16x1xf32> to vector<1xf32>
    %12 = vector.shape_cast %11 : vector<1xf32> to vector<1x1x1xf32>
    %13 = vector.extract %12[0, 0, 0] : f32 from vector<1x1x1xf32>
    %14 = vector.broadcast %7 : vector<16x1xf32> to vector<16x16xf32>
    %15 = arith.subf %5, %14 : vector<16x16xf32>
    %16 = math.exp %15 : vector<16x16xf32>
    %c0_7 = arith.constant 0 : index
    %c0_8 = arith.constant 0 : index
    %17 = vector.load %arg7[%c0_7, %c0_8] : memref<16x1xf32, #tpu.memory_space<vmem>>, vector<16x1xf32>
    %18 = arith.maximumf %17, %7 : vector<16x1xf32>
    %cst_9 = arith.constant 1.000000e+00 : f32
    %19 = vector.broadcast %cst_9 : f32 to vector<16x1xf32>
    %cst_10 = arith.constant dense<0.000000e+00> : vector<16x1xf32>
    %20 = tpu.matmul %16, %19, %cst_10 {dimension_numbers = #tpu.dot_dimension_numbers<[1], [0], [0], [1], [0, 0, 1, 1], [], []>} : vector<16x16xf32>, vector<16x1xf32>, vector<16x1xf32> -> vector<16x1xf32>
    %c0_11 = arith.constant 0 : index
    %c0_12 = arith.constant 0 : index
    %21 = vector.load %arg8[%c0_11, %c0_12] : memref<16x1xf32, #tpu.memory_space<vmem>>, vector<16x1xf32>
    %22 = arith.subf %17, %18 : vector<16x1xf32>
    %23 = math.exp %22 : vector<16x1xf32>
    %24 = arith.mulf %21, %23 : vector<16x1xf32>
    %25 = arith.subf %7, %18 : vector<16x1xf32>
    %26 = math.exp %25 : vector<16x1xf32>
    %27 = arith.mulf %20, %26 : vector<16x1xf32>
    %28 = arith.addf %24, %27 : vector<16x1xf32>
    %c0_13 = arith.constant 0 : index
    %c0_14 = arith.constant 0 : index
    %29 = vector.load %arg8[%c0_13, %c0_14] : memref<16x1xf32, #tpu.memory_space<vmem>>, vector<16x1xf32>
    tpu.vector_store %arg8[%c0_13, %c0_14], %28 {strides = array<i32>} : memref<16x1xf32, #tpu.memory_space<vmem>>, vector<16x1xf32>,
    %c0_15 = arith.constant 0 : index
    %c0_16 = arith.constant 0 : index
    %30 = vector.load %arg7[%c0_15, %c0_16] : memref<16x1xf32, #tpu.memory_space<vmem>>, vector<16x1xf32>
    tpu.vector_store %arg7[%c0_15, %c0_16], %18 {strides = array<i32>} : memref<16x1xf32, #tpu.memory_space<vmem>>, vector<16x1xf32>,
    %31 = vector.broadcast %13 : f32 to vector<16x1xf32>
    %32 = arith.subf %7, %31 : vector<16x1xf32>
    %33 = math.exp %32 : vector<16x1xf32>
    %cst_17 = arith.constant dense<0.000000e+00> : vector<1x16xf32>
    %34 = tpu.matmul %33, %16, %cst_17 {dimension_numbers = #tpu.dot_dimension_numbers<[0], [0], [1], [1], [0, 1, 1, 1], [], []>} : vector<16x1xf32>, vector<16x16xf32>, vector<1x16xf32> -> vector<1x16xf32>
    %35 = vector.broadcast %13 : f32 to vector<1x16xf32>
    %36 = arith.subf %35, %9 : vector<1x16xf32>
    %cst_18 = arith.constant 8.000000e+01 : f32
    %37 = vector.broadcast %cst_18 : f32 to vector<1x16xf32>
    %38 = arith.minimumf %36, %37 : vector<1x16xf32>
    %39 = math.exp %38 : vector<1x16xf32>
    %40 = arith.mulf %34, %39 : vector<1x16xf32>
    %41 = vector.shape_cast %9 : vector<1x16xf32> to vector<1x1x1x16xf32>
    %c0_19 = arith.constant 0 : index
    %c0_20 = arith.constant 0 : index
    %c0_21 = arith.constant 0 : index
    %c0_22 = arith.constant 0 : index
    %42 = vector.load %arg5[%c0_19, %c0_20, %c0_21, %c0_22] : memref<1x1x1x16xf32, #tpu.memory_space<vmem>>, vector<1x1x1x16xf32>
    tpu.vector_store %arg5[%c0_19, %c0_20, %c0_21, %c0_22], %41 {strides = array<i32>} : memref<1x1x1x16xf32, #tpu.memory_space<vmem>>, vector<1x1x1x16xf32>,
    %43 = vector.shape_cast %40 : vector<1x16xf32> to vector<1x1x1x16xf32>
    %c0_23 = arith.constant 0 : index
    %c0_24 = arith.constant 0 : index
    %c0_25 = arith.constant 0 : index
    %c0_26 = arith.constant 0 : index
    %44 = vector.load %arg6[%c0_23, %c0_24, %c0_25, %c0_26] : memref<1x1x1x16xf32, #tpu.memory_space<vmem>>, vector<1x1x1x16xf32>
    tpu.vector_store %arg6[%c0_23, %c0_24, %c0_25, %c0_26], %43 {strides = array<i32>} : memref<1x1x1x16xf32, #tpu.memory_space<vmem>>, vector<1x1x1x16xf32>,
    %c2_i32 = arith.constant 2 : i32
    %45 = arith.cmpi eq, %arg1, %c2_i32 : i32
    %46 = arith.extui %45 : i1 to i32
    %c0_i32_27 = arith.constant 0 : i32
    %47 = arith.cmpi ne, %46, %c0_i32_27 : i32
    scf.if %47 {
      %c0_28 = arith.constant 0 : index
      %c0_29 = arith.constant 0 : index
      %48 = vector.load %arg7[%c0_28, %c0_29] : memref<16x1xf32, #tpu.memory_space<vmem>>, vector<16x1xf32>
      %c0_30 = arith.constant 0 : index
      %c0_31 = arith.constant 0 : index
      %49 = vector.load %arg8[%c0_30, %c0_31] : memref<16x1xf32, #tpu.memory_space<vmem>>, vector<16x1xf32>
      %50 = math.log %49 : vector<16x1xf32>
      %51 = arith.addf %48, %50 : vector<16x1xf32>
      %c0_32 = arith.constant 0 : index
      %c0_33 = arith.constant 0 : index
      %52 = vector.load %arg4[%c0_32, %c0_33] : memref<16x1xf32, #tpu.memory_space<vmem>>, vector<16x1xf32>
      tpu.vector_store %arg4[%c0_32, %c0_33], %51 {strides = array<i32>} : memref<16x1xf32, #tpu.memory_space<vmem>>, vector<16x1xf32>,
    } else {
    }
    return
  }
  func.func @transform_0(%arg0: i32, %arg1: i32) -> (i32, i32) {
    %c0_i32 = arith.constant 0 : i32
    %c0_i32_0 = arith.constant 0 : i32
    return %arg0, %c0_i32 : i32, i32
  }
  func.func @transform_1(%arg0: i32, %arg1: i32) -> (i32, i32) {
    %c0_i32 = arith.constant 0 : i32
    %c0_i32_0 = arith.constant 0 : i32
    return %arg1, %c0_i32 : i32, i32
  }
  func.func @transform_2(%arg0: i32, %arg1: i32) -> (i32, i32) {
    %c0_i32 = arith.constant 0 : i32
    %c0_i32_0 = arith.constant 0 : i32
    return %arg0, %c0_i32 : i32, i32
  }
  func.func @transform_3(%arg0: i32, %arg1: i32) -> (i32, i32, i32, i32) {
    %c0_i32 = arith.constant 0 : i32
    %c0_i32_0 = arith.constant 0 : i32
    %c0_i32_1 = arith.constant 0 : i32
    return %arg0, %arg1, %c0_i32, %c0_i32_0 : i32, i32, i32, i32
  }
  func.func @transform_4(%arg0: i32, %arg1: i32) -> (i32, i32, i32, i32) {
    %c0_i32 = arith.constant 0 : i32
    %c0_i32_0 = arith.constant 0 : i32
    %c0_i32_1 = arith.constant 0 : i32
    return %arg0, %arg1, %c0_i32, %c0_i32_0 : i32, i32, i32, i32
  }
}

</mosaic_0001>

<llo_original>
// kernel: global_alignment_loss.1
$region0: #{global_alignment_loss.1}
  #allocation0 [shape = 'u32[]', space=smem, size = 0x4, offset = 0x4, fixed_abs, tag = 'smem constant byte address 0x4 - core index']
  #allocation1 [shape = 'u32[72,128]{1,0:T(1,128)}', space=vmem, size = 0x9000, scoped, tag = 'internal scratch']
  #allocation2 [shape = 'f32[16,1]{1,0:T(8,128)}', space=vmem, size = 0x2000, scoped, tag = 'scratch operand']
  #allocation3 [shape = 'f32[16,1]{1,0:T(8,128)}', space=vmem, size = 0x2000, scoped, tag = 'scratch operand']
  %s0 = inlined_call_operand.vmem [shape: bf16[48,64], index: 0, kind: input, shape index: {}]
  %s1 = inlined_call_operand.vmem [shape: bf16[48,64], index: 1, kind: input, shape index: {}]
  %s2 = inlined_call_operand.vmem [shape: f32[48,1], index: 2, kind: output, shape index: {0}]
  %s3 = inlined_call_operand.vmem [shape: f32[3,3,1,16], index: 3, kind: output, shape index: {1}]
  %s4 = inlined_call_operand.vmem [shape: f32[3,3,1,16], index: 4, kind: output, shape index: {2}]
  %5 = xla_tuple %s2, %s3, %s4
  %s6 = sld [smem:[#allocation0]]
  $region65: #{global_alignment_loss.1} parent=0
    _
  %s8 = ssub.s32 1, %s6
  %s9 = scalar_select 0, %s8, %s6
  loop: start=0, step=1, limit=11
  $region2: #{global_alignment_loss.1} parent=0 // loop_pre_header
    _
  $region3: #{global_alignment_loss.1} parent=0 // loop_header
    %s11 = sphi 0, %s15
    %p12 = scmp.ge.s32.totalorder %s11, 11
    %s18 = sphi 0, %s30
    %s19 = sphi 0, %s26
    %s20 = sphi 0, %s18
    %s21 = sphi 0, %s19
    %s22 = sphi 0, %s20
    %s23 = sphi 0, %s21
    %s33 = sphi 0, %s35
    %s36 = sphi 0, %s33
    %s37 = sphi 0, %s36
    %s53 = sphi 0, %s37
    %s59 = sphi 0, %s61
    %s62 = sphi 0, %s59
    %s63 = sphi 0, %s62
    %s79 = sphi 0, %s63
    %s85 = sphi 0, %s87
    %s88 = sphi 0, %s85
    %s89 = sphi 0, %s88
    %s105 = sphi 0, %s89
    %s113 = sphi 0, %s115
    %s116 = sphi 0, %s113
    %s117 = sphi 0, %s116
    %s133 = sphi 0, %s117
    %s141 = sphi 0, %s143
    %s144 = sphi 0, %s141
    %s145 = sphi 0, %s144
    %s161 = sphi 0, %s145
  $region4: #{global_alignment_loss.1} parent=0 // loop_header_branch
    %14 = sbr.rel (%p12) target = $region8
  $region5: #{global_alignment_loss.1} parent=0 // loop_body
    %s16 = ssub.s32 %s11, 1
    %s17 = ssub.s32 %s11, 2
    %s24 = sadd.s32 1, %s19
    %p25 = scmp.ge.s32.totalorder %s24, 3
    %s26 = scalar_select %p25, 0, %s24
    %s27 = sadd.s32 1, %s18
    %s28 = scalar_select %p25, %s27, %s18
    %p29 = scmp.ge.s32.totalorder %s28, 3
    %s30 = scalar_select %p29, 0, %s28
    %s31 = ssub.s32 %s18, %s30
    %p32 = scmp.eq.s32.totalorder %s31, 0
    %s34 = sadd.s32 %s33, 1
    %s35 = scalar_select %p32, %s33, %s34
    %p38 = pneg %p32
    %p39 = scmp.eq.s32.totalorder %s11, 8
    %p40 = por %p38, %p39
    %p41 = scmp.ne.s32.totalorder %s33, %s36
    %p42 = scmp.eq.s32.totalorder %s11, 0
    %p43 = por %p41, %p42
    %p44 = scmp.ne.s32.totalorder %s33, %s36
    %p45 = scmp.eq.s32.totalorder %s16, 8
    %p46 = por %p44, %p45
    %p47 = scmp.ne.s32.totalorder %s36, %s37
    %p48 = scmp.eq.s32.totalorder %s16, 0
    %p49 = por %p47, %p48
    %p50 = scmp.ne.s32.totalorder %s36, %s37
    %p51 = scmp.eq.s32.totalorder %s17, 8
    %p52 = por %p50, %p51
    %p54 = scmp.ne.s32.totalorder %s37, %s53
    %p55 = scmp.eq.s32.totalorder %s17, 0
    %p56 = por %p54, %p55
    %s57 = ssub.s32 %s19, %s26
    %p58 = scmp.eq.s32.totalorder %s57, 0
    %s60 = sadd.s32 %s59, 1
    %s61 = scalar_select %p58, %s59, %s60
    %p64 = pneg %p58
    %p65 = scmp.eq.s32.totalorder %s11, 8
    %p66 = por %p64, %p65
    %p67 = scmp.ne.s32.totalorder %s59, %s62
    %p68 = scmp.eq.s32.totalorder %s11, 0
    %p69 = por %p67, %p68
    %p70 = scmp.ne.s32.totalorder %s59, %s62
    %p71 = scmp.eq.s32.totalorder %s16, 8
    %p72 = por %p70, %p71
    %p73 = scmp.ne.s32.totalorder %s62, %s63
    %p74 = scmp.eq.s32.totalorder %s16, 0
    %p75 = por %p73, %p74
    %p76 = scmp.ne.s32.totalorder %s62, %s63
    %p77 = scmp.eq.s32.totalorder %s17, 8
    %p78 = por %p76, %p77
    %p80 = scmp.ne.s32.totalorder %s63, %s79
    %p81 = scmp.eq.s32.totalorder %s17, 0
    %p82 = por %p80, %p81
    %s83 = ssub.s32 %s18, %s30
    %p84 = scmp.eq.s32.totalorder %s83, 0
    %s86 = sadd.s32 %s85, 1
    %s87 = scalar_select %p84, %s85, %s86
    %p90 = pneg %p84
    %p91 = scmp.eq.s32.totalorder %s11, 8
    %p92 = por %p90, %p91
    %p93 = scmp.ne.s32.totalorder %s85, %s88
    %p94 = scmp.eq.s32.totalorder %s11, 0
    %p95 = por %p93, %p94
    %p96 = scmp.ne.s32.totalorder %s85, %s88
    %p97 = scmp.eq.s32.totalorder %s16, 8
    %p98 = por %p96, %p97
    %p99 = scmp.ne.s32.totalorder %s88, %s89
    %p100 = scmp.eq.s32.totalorder %s16, 0
    %p101 = por %p99, %p100
    %p102 = scmp.ne.s32.totalorder %s88, %s89
    %p103 = scmp.eq.s32.totalorder %s17, 8
    %p104 = por %p102, %p103
    %p106 = scmp.ne.s32.totalorder %s89, %s105
    %p107 = scmp.eq.s32.totalorder %s17, 0
    %p108 = por %p106, %p107
    %s109 = ssub.s32 %s18, %s30
    %s110 = ssub.s32 %s19, %s26
    %s111 = sor.u32 %s109, %s110
    %p112 = scmp.eq.s32.totalorder %s111, 0
    %s114 = sadd.s32 %s113, 1
    %s115 = scalar_select %p112, %s113, %s114
    %p118 = pneg %p112
    %p119 = scmp.eq.s32.totalorder %s11, 8
    %p120 = por %p118, %p119
    %p121 = scmp.ne.s32.totalorder %s113, %s116
    %p122 = scmp.eq.s32.totalorder %s11, 0
    %p123 = por %p121, %p122
    %p124 = scmp.ne.s32.totalorder %s113, %s116
    %p125 = scmp.eq.s32.totalorder %s16, 8
    %p126 = por %p124, %p125
    %p127 = scmp.ne.s32.totalorder %s116, %s117
    %p128 = scmp.eq.s32.totalorder %s16, 0
    %p129 = por %p127, %p128
    %p130 = scmp.ne.s32.totalorder %s116, %s117
    %p131 = scmp.eq.s32.totalorder %s17, 8
    %p132 = por %p130, %p131
    %p134 = scmp.ne.s32.totalorder %s117, %s133
    %p135 = scmp.eq.s32.totalorder %s17, 0
    %p136 = por %p134, %p135
    %s137 = ssub.s32 %s18, %s30
    %s138 = ssub.s32 %s19, %s26
    %s139 = sor.u32 %s137, %s138
    %p140 = scmp.eq.s32.totalorder %s139, 0
    %s142 = sadd.s32 %s141, 1
    %s143 = scalar_select %p140, %s141, %s142
    %p146 = pneg %p140
    %p147 = scmp.eq.s32.totalorder %s11, 8
    %p148 = por %p146, %p147
    %p149 = scmp.ne.s32.totalorder %s141, %s144
    %p150 = scmp.eq.s32.totalorder %s11, 0
    %p151 = por %p149, %p150
    %p152 = scmp.ne.s32.totalorder %s141, %s144
    %p153 = scmp.eq.s32.totalorder %s16, 8
    %p154 = por %p152, %p153
    %p155 = scmp.ne.s32.totalorder %s144, %s145
    %p156 = scmp.eq.s32.totalorder %s16, 0
    %p157 = por %p155, %p156
    %p158 = scmp.ne.s32.totalorder %s144, %s145
    %p159 = scmp.eq.s32.totalorder %s17, 8
    %p160 = por %p158, %p159
    %p162 = scmp.ne.s32.totalorder %s145, %s161
    %p163 = scmp.eq.s32.totalorder %s17, 0
    %p164 = por %p162, %p163
    %p165 = scmp.le.s32.totalorder 1, %s11
    %p166 = scmp.lt.s32.totalorder %s11, 10
    %p167 = pnand %p165, %p166
    %p168 = pneg %p167
    // Predicated region
    $region9: #{global_alignment_loss.1} parent=5 // pred_check
      _
    $region10: #{global_alignment_loss.1} parent=5 // pred_check_branch
      %170 = sbr.rel (%p167) target = $region12
    $region11: #{global_alignment_loss.1} parent=5 // pred_region
      %s171 = ssub.s32 %s11, 1
    $region12: #{global_alignment_loss.1} parent=5 // pred_fallthru
      _
    %p172 = scmp.lt.s32.totalorder %s11, 9
    // Predicated region
    $region13: #{global_alignment_loss.1} parent=5 // pred_check
      %p173 = pneg %p172
    $region14: #{global_alignment_loss.1} parent=5 // pred_check_branch
      %175 = sbr.rel (%p173) target = $region16
    $region15: #{global_alignment_loss.1} parent=5 // pred_region
      // Predicated region
      $region17: #{global_alignment_loss.1} parent=15 // pred_check
        %p176 = pneg %p43
      $region18: #{global_alignment_loss.1} parent=15 // pred_check_branch
        %178 = sbr.rel (%p176) target = $region20
      $region19: #{global_alignment_loss.1} parent=15 // pred_region
        %s179 = smul.u32 2, %s18
        %p180 = scmp.lt.s32.totalorder %s179, 5
        %s181 = scalar_select %p180, %s179, 5
        %s182 = smul.addr %s181, 4
        %s183 = scalar_lea.vmem %s0, %s182
        %s184 = smul.u32 2, %s18
      $region20: #{global_alignment_loss.1} parent=15 // pred_fallthru
        _
      // Predicated region
      $region21: #{global_alignment_loss.1} parent=15 // pred_check
        %p185 = pneg %p69
      $region22: #{global_alignment_loss.1} parent=15 // pred_check_branch
        %187 = sbr.rel (%p185) target = $region24
      $region23: #{global_alignment_loss.1} parent=15 // pred_region
        %s188 = smul.u32 2, %s19
        %p189 = scmp.lt.s32.totalorder %s188, 5
        %s190 = scalar_select %p189, %s188, 5
        %s191 = smul.addr %s190, 4
        %s192 = scalar_lea.vmem %s1, %s191
        %s193 = smul.u32 2, %s19
      $region24: #{global_alignment_loss.1} parent=15 // pred_fallthru
        _
    $region16: #{global_alignment_loss.1} parent=5 // pred_fallthru
      _
    %p194 = scmp.le.s32.totalorder 1, %s11
    %p195 = scmp.lt.s32.totalorder %s11, 10
    %p196 = pnand %p194, %p195
    %p197 = pneg %p196
    // Predicated region
    $region25: #{global_alignment_loss.1} parent=5 // pred_check
      _
    $region26: #{global_alignment_loss.1} parent=5 // pred_check_branch
      %199 = sbr.rel (%p196) target = $region28
    $region27: #{global_alignment_loss.1} parent=5 // pred_region
      %s200 = ssub.s32 %s11, 1
      %s201 = smul.u32 2, %s20
      %p202 = scmp.lt.s32.totalorder %s201, 5
      %s203 = scalar_select %p202, %s201, 5
      %s204 = smul.addr %s203, 4
      %s205 = scalar_lea.vmem %s0, %s204
      %p206 = pneg %p49
      %p207 = pneg %p46
      %s208 = smul.u32 2, %s21
      %p209 = scmp.lt.s32.totalorder %s208, 5
      %s210 = scalar_select %p209, %s208, 5
      %s211 = smul.addr %s210, 4
      %s212 = scalar_lea.vmem %s1, %s211
      %p213 = pneg %p75
      %p214 = pneg %p72
      %p215 = pneg %p101
      %p216 = pneg %p98
      %s217 = smul.u32 2, %s20
      %p218 = scmp.lt.s32.totalorder %s217, 5
      %s219 = scalar_select %p218, %s217, 5
      %s220 = smul.addr %s219, 8
      %s221 = scalar_lea.vmem %s2, %s220
      %p222 = pneg %p129
      %p223 = pneg %p126
      %p224 = scmp.lt.s32.totalorder %s20, 2
      %s225 = scalar_select %p224, %s20, 2
      %p226 = scmp.lt.s32.totalorder %s21, 2
      %s227 = scalar_select %p226, %s21, 2
      %s228 = smul.addr %s225, 3
      %s229 = sadd.s32 %s227, %s228
      %s230 = scalar_lea.vmem %s3, %s229
      %p231 = pneg %p157
      %p232 = pneg %p154
      %p233 = scmp.lt.s32.totalorder %s20, 2
      %s234 = scalar_select %p233, %s20, 2
      %p235 = scmp.lt.s32.totalorder %s21, 2
      %s236 = scalar_select %p235, %s21, 2
      %s237 = smul.addr %s234, 3
      %s238 = sadd.s32 %s236, %s237
      %s239 = scalar_lea.vmem %s4, %s238
      %s240 = smul.u32 2, %s20
      %p241 = scmp.lt.s32.totalorder %s240, 5
      %s242 = scalar_select %p241, %s240, 5
      %s243 = smul.addr %s242, 4
      %s244 = scalar_lea.vmem %s0, %s243
      %s245 = smul.u32 2, %s20
      %s246 = smul.u32 2, %s21
      %p247 = scmp.lt.s32.totalorder %s246, 5
      %s248 = scalar_select %p247, %s246, 5
      %s249 = smul.addr %s248, 4
      %s250 = scalar_lea.vmem %s1, %s249
      %s251 = smul.u32 2, %s21
      %s252 = smul.u32 2, %s20
      %p253 = scmp.lt.s32.totalorder %s252, 5
      %s254 = scalar_select %p253, %s252, 5
      %s255 = smul.addr %s254, 8
      %s256 = scalar_lea.vmem %s2, %s255
      %s257 = smul.u32 2, %s20
      %p258 = scmp.lt.s32.totalorder %s20, 2
      %s259 = scalar_select %p258, %s20, 2
      %p260 = scmp.lt.s32.totalorder %s21, 2
      %s261 = scalar_select %p260, %s21, 2
      %s262 = smul.addr %s259, 3
      %s263 = sadd.s32 %s261, %s262
      %s264 = scalar_lea.vmem %s3, %s263
      %p265 = scmp.lt.s32.totalorder %s20, 2
      %s266 = scalar_select %p265, %s20, 2
      %p267 = scmp.lt.s32.totalorder %s21, 2
      %s268 = scalar_select %p267, %s21, 2
      %s269 = smul.addr %s266, 3
      %s270 = sadd.s32 %s268, %s269
      %s271 = scalar_lea.vmem %s4, %s270
      %p273 = scmp.eq.s32.totalorder %s21, 0
      // Predicated region
      $region29: #{global_alignment_loss.1} parent=27 // pred_check
        %p274 = pneg %p273
      $region30: #{global_alignment_loss.1} parent=27 // pred_check_branch
        %276 = sbr.rel (%p274) target = $region32
      $region31: #{global_alignment_loss.1} parent=27 // pred_region
        %vm277 = vcmask 7168
        %278 = vst.msk [vmem:[#allocation2] sm:$0xff] %vm277, -inf
        %279 = vst.msk [vmem:[#allocation2 + $0x8] sm:$0xff] %vm277, -inf
        %280 = vst.msk [vmem:[#allocation3] sm:$0xff] %vm277, 0.0
        %281 = vst.msk [vmem:[#allocation3 + $0x8] sm:$0xff] %vm277, 0.0
      $region32: #{global_alignment_loss.1} parent=27 // pred_fallthru
        _
      %v282 = vld [vmem:[%s244] sm:$0xf]
      %v283 = vld [vmem:[%s244 + $0x4] sm:$0xf]
      %v284 = vld [vmem:[%s250] sm:$0xf]
      %v285 = vld [vmem:[%s250 + $0x4] sm:$0xf]
      %v288 = vunpack.c.l.b16 %v282
      %v289 = vunpack.c.l.b16 %v283
      %v290 = vpack.c.b16 %v289, %v288
      %v293 = vunpack.c.l.b16 %v284
      %v294 = vunpack.c.l.b16 %v285
      %v295 = vpack.c.b16 %v294, %v293
      %vm296 = vcmask 523264
      %v298 = vsel %vm296, %v290, 0
      %v301 = vsel %vm296, %v295, 0
      %303 = vmatpush.bf16.xpose.msra.mxu0 0
      %304 = vmatpush.bf16.xpose.msra.mxu0 0
      %305 = vmatpush.bf16.xpose.msra.mxu0 0
      %306 = vmatpush.bf16.xpose.msra.mxu0 0
      %307 = vmatpush.bf16.xpose.msra.mxu0 0
      %308 = vmatpush.bf16.xpose.msra.mxu0 0
      %309 = vmatpush.bf16.xpose.msra.mxu0 0
      %310 = vmatpush.bf16.xpose.msra.mxu0 %v301
      %311 = vmatmul.bf16.gmra.mxu0 %v298
      %v312 = vpop.f32.mrf.mxu0
      %v313 = vadd.f32 0.0, %v312
      %v314 = vpop.f32.mrf.mxu0
      %v315 = vadd.f32 0.0, %v314
      %316 = vdwg.mxu0
      %vm317 = vcmask 130048
      %v318 = vsel %vm317, %v313, -inf
      %319 = vmax.xlane.f32.xlu0 %v318
      %v320 = vpop.xlane.xlu0 %319
      %v321 = vsel %vm317, %v315, -inf
      %322 = vmax.xlane.f32.xlu0 %v321
      %v323 = vpop.xlane.xlu0 %322
      %v324 = vmax.f32 %v318, %v321
      %v325 = vrot.slane %v324, 4
      %v326 = vmax.f32 %v324, %v325
      %v327 = vrot.slane %v326, 2
      %v328 = vmax.f32 %v326, %v327
      %v329 = vrot.slane %v328, 1
      %v330 = vmax.f32 %v328, %v329
      %v331 = vmax.f32 %v320, %v323
      %v332 = vrot.slane %v331, 4
      %v333 = vmax.f32 %v331, %v332
      %v334 = vrot.slane %v333, 2
      %v335 = vmax.f32 %v333, %v334
      %v336 = vrot.slane %v335, 1
      %v337 = vmax.f32 %v335, %v336
      %s338 = vtos %v337
      %v339 = vsub.f32 %v313, %v320
      %v340 = vsub.f32 %v315, %v323
      %v341 = vmul.f32 %v339, 1.442695
      %v342 = vpow.pop %v341
      %v343 = vmul.f32 %v340, 1.442695
      %v344 = vpow.pop %v343
      %v345 = vld [vmem:[#allocation2] sm:$0xff]
      %v346 = vld [vmem:[#allocation2 + $0x8] sm:$0xff]
      %v347 = vmax.f32 %v345, %v320
      %v348 = vmax.f32 %v346, %v323
      %v350 = vsel %vm317, %v342, 0
      %v353 = vsel %vm317, %v344, 0
      %355 = vmatpush.msra.mxu0 0.0
      %356 = vmatpush.msra.mxu0 0.0
      %357 = vmatpush.msra.mxu0 0.0
      %358 = vmatpush.msra.mxu0 0.0
      %359 = vmatpush.msra.mxu0 0.0
      %360 = vmatpush.msra.mxu0 0.0
      %361 = vmatpush.msra.mxu0 0.0
      %362 = vmatpush.msra.mxu0 0.0
      %363 = vmatpush.msra.mxu0 0.0
      %364 = vmatpush.msra.mxu0 0.0
      %365 = vmatpush.msra.mxu0 0.0
      %366 = vmatpush.msra.mxu0 0.0
      %367 = vmatpush.msra.mxu0 0.0
      %368 = vmatpush.msra.mxu0 0.0
      %369 = vmatpush.msra.mxu0 1.0
      %370 = vmatpush.msra.mxu0 1.0
      %371 = vmatmul.f32.gmra.mxu0 %v350
      %v372 = vpop.f32.mrf.mxu0
      %v373 = vadd.f32 0.0, %v372
      %374 = vmatmul.f32.gmra.mxu0 %v353
      %v375 = vpop.f32.mrf.mxu0
      %v376 = vadd.f32 0.0, %v375
      %377 = vdwg.mxu0
      %v378 = vld [vmem:[#allocation3] sm:$0xff]
      %v379 = vld [vmem:[#allocation3 + $0x8] sm:$0xff]
      %v380 = vsub.f32 %v345, %v347
      %v381 = vsub.f32 %v346, %v348
      %v382 = vmul.f32 %v380, 1.442695
      %v383 = vpow.pop %v382
      %v384 = vmul.f32 %v381, 1.442695
      %v385 = vpow.pop %v384
      %v386 = vmul.f32 %v378, %v383
      %v387 = vmul.f32 %v379, %v385
      %v388 = vsub.f32 %v320, %v347
      %v389 = vsub.f32 %v323, %v348
      %v390 = vmul.f32 %v388, 1.442695
      %v391 = vpow.pop %v390
      %v392 = vmul.f32 %v389, 1.442695
      %v393 = vpow.pop %v392
      %v394 = vmul.f32 %v373, %v391
      %v395 = vmul.f32 %v376, %v393
      %v396 = vadd.f32 %v386, %v394
      %v397 = vadd.f32 %v387, %v395
      %vm398 = vcmask 7168
      %399 = vst.msk [vmem:[#allocation3] sm:$0xff] %vm398, %v396
      %400 = vst.msk [vmem:[#allocation3 + $0x8] sm:$0xff] %vm398, %v397
      %401 = vst.msk [vmem:[#allocation2] sm:$0xff] %vm398, %v347
      %402 = vst.msk [vmem:[#allocation2 + $0x8] sm:$0xff] %vm398, %v348
      %v403 = vstv %s338
      %v404 = vsub.f32 %v320, %v403
      %v405 = vsub.f32 %v323, %v403
      %v406 = vmul.f32 %v404, 1.442695
      %v407 = vpow.pop %v406
      %v408 = vmul.f32 %v405, 1.442695
      %v409 = vpow.pop %v408
      %410 = vxpose.xlu0.b32.start [1/16] %v407, 128
      %411 = vxpose.xlu0.b32.cont [2/16] %v409, 128
      %412 = vxpose.xlu0.b32.cont [3/16] 0.0, 128
      %413 = vxpose.xlu0.b32.cont [4/16] 0.0, 128
      %414 = vxpose.xlu0.b32.cont [5/16] 0.0, 128
      %415 = vxpose.xlu0.b32.cont [6/16] 0.0, 128
      %416 = vxpose.xlu0.b32.cont [7/16] 0.0, 128
      %417 = vxpose.xlu0.b32.cont [8/16] 0.0, 128
      %418 = vxpose.xlu0.b32.cont [9/16] 0.0, 128
      %419 = vxpose.xlu0.b32.cont [10/16] 0.0, 128
      %420 = vxpose.xlu0.b32.cont [11/16] 0.0, 128
      %421 = vxpose.xlu0.b32.cont [12/16] 0.0, 128
      %422 = vxpose.xlu0.b32.cont [13/16] 0.0, 128
      %423 = vxpose.xlu0.b32.cont [14/16] 0.0, 128
      %424 = vxpose.xlu0.b32.cont [15/16] 0.0, 128
      %425 = vxpose.xlu0.b32.end [16/16] 0.0, 128
      %v426 = vpop.trf.xlu0
      %v427 = vpop.trf.xlu0
      %v428 = vpop.trf.xlu0
      %v429 = vpop.trf.xlu0
      %v430 = vpop.trf.xlu0
      %v431 = vpop.trf.xlu0
      %v432 = vpop.trf.xlu0
      %v433 = vpop.trf.xlu0
      %v434 = vpop.trf.xlu0
      %v435 = vpop.trf.xlu0
      %v436 = vpop.trf.xlu0
      %v437 = vpop.trf.xlu0
      %v438 = vpop.trf.xlu0
      %v439 = vpop.trf.xlu0
      %v440 = vpop.trf.xlu0
      %v441 = vpop.trf.xlu0
      %v443 = vsel %vm317, %v426, 0
      %445 = vmatpush.msra.mxu0 0.0
      %446 = vmatpush.msra.mxu0 0.0
      %447 = vmatpush.msra.mxu0 0.0
      %448 = vmatpush.msra.mxu0 0.0
      %449 = vmatpush.msra.mxu0 0.0
      %450 = vmatpush.msra.mxu0 0.0
      %451 = vmatpush.msra.mxu0 0.0
      %452 = vmatpush.msra.mxu0 0.0
      %453 = vmatpush.msra.mxu0 0.0
      %454 = vmatpush.msra.mxu0 0.0
      %455 = vmatpush.msra.mxu0 0.0
      %456 = vmatpush.msra.mxu0 0.0
      %457 = vmatpush.msra.mxu0 0.0
      %458 = vmatpush.msra.mxu0 0.0
      %459 = vmatpush.msra.mxu0 %v344
      %460 = vmatpush.msra.mxu0 %v342
      %461 = vmatmul.f32.gmra.mxu0 %v443
      %v462 = vpop.f32.mrf.mxu0
      %v463 = vadd.f32 0.0, %v462
      %464 = vdwg.mxu0
      %v465 = vsub.f32 %v403, %v330
      %v466 = vmin.f32 %v465, 80.0
      %v467 = vmul.f32 %v466, 1.442695
      %v468 = vpow.pop %v467
      %v469 = vmul.f32 %v463, %v468
      %vm470 = vcmask 122880
      %471 = vst.msk [vmem:[%s264] sm:$0x1] %vm470, %v330
      %472 = vst.msk [vmem:[%s271] sm:$0x1] %vm470, %v469
      %p473 = scmp.eq.s32.totalorder %s21, 2
      // Predicated region
      $region33: #{global_alignment_loss.1} parent=27 // pred_check
        %p474 = pneg %p473
      $region34: #{global_alignment_loss.1} parent=27 // pred_check_branch
        %476 = sbr.rel (%p474) target = $region36
      $region35: #{global_alignment_loss.1} parent=27 // pred_region
        %v477 = vld [vmem:[#allocation2] sm:$0xff]
        %v478 = vld [vmem:[#allocation2 + $0x8] sm:$0xff]
        %v479 = vld [vmem:[#allocation3] sm:$0xff]
        %v480 = vld [vmem:[#allocation3 + $0x8] sm:$0xff]
        %v481 = vlog2.pop %v479
        %v482 = vmul.f32 %v481, 0.6931472
        %v483 = vlog2.pop %v480
        %v484 = vmul.f32 %v483, 0.6931472
        %v485 = vadd.f32 %v477, %v482
        %v486 = vadd.f32 %v478, %v484
        %487 = vst.msk [vmem:[%s256] sm:$0xff] %vm398, %v485
        %488 = vst.msk [vmem:[%s256 + $0x8] sm:$0xff] %vm398, %v486
      $region36: #{global_alignment_loss.1} parent=27 // pred_fallthru
        _
      %s489 = smul.u32 2, %s20
      %p490 = scmp.lt.s32.totalorder %s489, 5
      %s491 = scalar_select %p490, %s489, 5
      %s492 = smul.addr %s491, 8
      %s493 = scalar_lea.vmem %s2, %s492
      %p494 = scmp.lt.s32.totalorder %s20, 2
      %s495 = scalar_select %p494, %s20, 2
      %p496 = scmp.lt.s32.totalorder %s21, 2
      %s497 = scalar_select %p496, %s21, 2
      %s498 = smul.addr %s495, 3
      %s499 = sadd.s32 %s497, %s498
      %s500 = scalar_lea.vmem %s3, %s499
      %p501 = scmp.lt.s32.totalorder %s20, 2
      %s502 = scalar_select %p501, %s20, 2
      %p503 = scmp.lt.s32.totalorder %s21, 2
      %s504 = scalar_select %p503, %s21, 2
      %s505 = smul.addr %s502, 3
      %s506 = sadd.s32 %s504, %s505
      %s507 = scalar_lea.vmem %s4, %s506
      // Predicated region
      $region37: #{global_alignment_loss.1} parent=27 // pred_check
        %p508 = pneg %p98
      $region38: #{global_alignment_loss.1} parent=27 // pred_check_branch
        %510 = sbr.rel (%p508) target = $region40
      $region39: #{global_alignment_loss.1} parent=27 // pred_region
        %s511 = smul.u32 2, %s20
      $region40: #{global_alignment_loss.1} parent=27 // pred_fallthru
        _
      // Predicated region
      $region41: #{global_alignment_loss.1} parent=27 // pred_check
        %p512 = pneg %p126
      $region42: #{global_alignment_loss.1} parent=27 // pred_check_branch
        %514 = sbr.rel (%p512) target = $region44
      $region43: #{global_alignment_loss.1} parent=27 // pred_region
        _
      $region44: #{global_alignment_loss.1} parent=27 // pred_fallthru
        _
      // Predicated region
      $region45: #{global_alignment_loss.1} parent=27 // pred_check
        %p515 = pneg %p154
      $region46: #{global_alignment_loss.1} parent=27 // pred_check_branch
        %517 = sbr.rel (%p515) target = $region48
      $region47: #{global_alignment_loss.1} parent=27 // pred_region
        _
      $region48: #{global_alignment_loss.1} parent=27 // pred_fallthru
        _
    $region28: #{global_alignment_loss.1} parent=5 // pred_fallthru
      _
    %p518 = scmp.le.s32.totalorder 2, %s11
    // Predicated region
    $region49: #{global_alignment_loss.1} parent=5 // pred_check
      %p519 = pneg %p518
    $region50: #{global_alignment_loss.1} parent=5 // pred_check_branch
      %521 = sbr.rel (%p519) target = $region52
    $region51: #{global_alignment_loss.1} parent=5 // pred_region
      %s522 = ssub.s32 %s11, 2
      // Predicated region
      $region53: #{global_alignment_loss.1} parent=51 // pred_check
        %p523 = pneg %p104
      $region54: #{global_alignment_loss.1} parent=51 // pred_check_branch
        %525 = sbr.rel (%p523) target = $region56
      $region55: #{global_alignment_loss.1} parent=51 // pred_region
        %s526 = smul.u32 2, %s22
        %p527 = scmp.lt.s32.totalorder %s526, 5
        %s528 = scalar_select %p527, %s526, 5
        %s529 = smul.addr %s528, 8
        %s530 = scalar_lea.vmem %s2, %s529
      $region56: #{global_alignment_loss.1} parent=51 // pred_fallthru
        _
      // Predicated region
      $region57: #{global_alignment_loss.1} parent=51 // pred_check
        %p531 = pneg %p132
      $region58: #{global_alignment_loss.1} parent=51 // pred_check_branch
        %533 = sbr.rel (%p531) target = $region60
      $region59: #{global_alignment_loss.1} parent=51 // pred_region
        %p534 = scmp.lt.s32.totalorder %s22, 2
        %s535 = scalar_select %p534, %s22, 2
        %p536 = scmp.lt.s32.totalorder %s23, 2
        %s537 = scalar_select %p536, %s23, 2
        %s538 = smul.addr %s535, 3
        %s539 = sadd.s32 %s537, %s538
        %s540 = scalar_lea.vmem %s3, %s539
      $region60: #{global_alignment_loss.1} parent=51 // pred_fallthru
        _
      // Predicated region
      $region61: #{global_alignment_loss.1} parent=51 // pred_check
        %p541 = pneg %p160
      $region62: #{global_alignment_loss.1} parent=51 // pred_check_branch
        %543 = sbr.rel (%p541) target = $region64
      $region63: #{global_alignment_loss.1} parent=51 // pred_region
        %p544 = scmp.lt.s32.totalorder %s22, 2
        %s545 = scalar_select %p544, %s22, 2
        %p546 = scmp.lt.s32.totalorder %s23, 2
        %s547 = scalar_select %p546, %s23, 2
        %s548 = smul.addr %s545, 3
        %s549 = sadd.s32 %s547, %s548
        %s550 = scalar_lea.vmem %s4, %s549
      $region64: #{global_alignment_loss.1} parent=51 // pred_fallthru
        _
    $region52: #{global_alignment_loss.1} parent=5 // pred_fallthru
      _
  $region6: #{global_alignment_loss.1} parent=0 // loop_footer
    %s15 = sadd.s32 1, %s11
  $region7: #{global_alignment_loss.1} parent=0 // loop_footer_branch
    %10 = sbr.rel target = $region3
  $region8: #{global_alignment_loss.1} parent=0 // loop_exit
    _

</llo_original>
